<compile_context>
chip_gen: v5e
topology: v5e:2x2
jax: 0.10.0
libtpu: 0.0.40
codegen_flags: <defaults>
</compile_context>

<pallas_src>
import math

import jax
import jax.numpy as jnp
from jax.experimental import pallas as pl
from jax.experimental.pallas import tpu as pltpu

_LANES = 128


def _copy_kernel(x_ref, o_ref):
    # Identity forward: write the parameter tile through unchanged.
    o_ref[...] = x_ref[...]


def _pick_tile_rows(rows: int, itemsize: int) -> int:
    """Largest row tile that (a) divides `rows`, (b) is 8-aligned (or full),
    (c) keeps a block around <=4 MiB so 2x-buffered in+out fits v7x VMEM."""
    max_rows = max(8, (4 * 1024 * 1024) // (_LANES * itemsize))
    if rows <= max_rows:
        return rows  # single block / full-dim exception covers non-8-multiples
    start = max_rows - (max_rows % 8)
    for t in range(start, 7, -8):
        if rows % t == 0:
            return t
    return rows  # no aligned divisor; fall back to one big block


def generated_image_forward(weight: jax.Array) -> jax.Array:
    """Pallas equivalent of GeneratedImage.forward(): returns `weight`."""
    shape = weight.shape
    total = math.prod(shape)
    itemsize = jnp.dtype(weight.dtype).itemsize
    cost = pl.CostEstimate(
        flops=0, transcendentals=0, bytes_accessed=2 * total * itemsize
    )

    if total % _LANES == 0:
        # Lane-dense 2D slab: last dim = 128 lanes (full vreg width).
        rows = total // _LANES
        flat = jnp.reshape(weight, (rows, _LANES))
        tile_rows = _pick_tile_rows(rows, itemsize)
        grid = (rows // tile_rows,)
        spec = pl.BlockSpec((tile_rows, _LANES), lambda i: (i, 0))
        out_flat = pl.pallas_call(
            _copy_kernel,
            out_shape=jax.ShapeDtypeStruct((rows, _LANES), weight.dtype),
            grid_spec=pltpu.PrefetchScalarGridSpec(
                num_scalar_prefetch=0,
                grid=grid,
                in_specs=[spec],
                out_specs=spec,
            ),
            input_output_aliases={0: 0},  # in-place: no fresh HBM output buffer
            compiler_params=pltpu.CompilerParams(
                dimension_semantics=("parallel",),  # lets v7x split across 2 TCs
            ),
            cost_estimate=cost,
        )(flat)
        return jnp.reshape(out_flat, shape)

    # Fallback (total not a multiple of 128): one whole-array block
    # (block dims equal full array dims -> valid tiling).
    spec = pl.BlockSpec(tuple(shape), lambda i: (0,) * len(shape))
    return pl.pallas_call(
        _copy_kernel,
        out_shape=jax.ShapeDtypeStruct(shape, weight.dtype),
        grid_spec=pltpu.PrefetchScalarGridSpec(
            num_scalar_prefetch=0,
            grid=(1,),
            in_specs=[spec],
            out_specs=spec,
        ),
        input_output_aliases={0: 0},
        compiler_params=pltpu.CompilerParams(
            dimension_semantics=("arbitrary",),
        ),
        cost_estimate=cost,
    )(weight)


if __name__ == "__main__":
    # Deterministic parameter init, mirroring torch.rand(*img_shape) (U[0,1)).
    img_shape = (2, 4, 16, 16)  # (N, C, H, W)
    key = jax.random.PRNGKey(0)
    weight = jax.random.uniform(key, img_shape, dtype=jnp.float32)

    forward = jax.jit(generated_image_forward)
    out = forward(weight)
    out = jax.block_until_ready(out)

    # Forward must be exactly the parameter itself.
    assert out.shape == img_shape
    assert out.dtype == jnp.float32
    assert bool(jnp.array_equal(out, weight))

    print("KERNEL_OK")
</pallas_src>

<mosaic_0001>
module attributes {stable_mosaic.version = 11 : i64} {
  func.func @_copy_kernel(%arg0: i32, %arg1: memref<16x128xf32, #tpu.memory_space<vmem>>, %arg2: memref<16x128xf32, #tpu.memory_space<vmem>>) attributes {dimension_semantics = [#tpu.dimension_semantics<parallel>], iteration_bounds = array<i64: 1>, scalar_prefetch = 0 : i64, scratch_operands = 0 : i64, tpu.core_type = #tpu.core_type<tc>, window_params = [{transform_indices = @transform_0, window_bounds = array<i64: 16, 128>}, {transform_indices = @transform_1, window_bounds = array<i64: 16, 128>}]} {
    %c0 = arith.constant 0 : index
    %c0_0 = arith.constant 0 : index
    %0 = vector.load %arg1[%c0, %c0_0] : memref<16x128xf32, #tpu.memory_space<vmem>>, vector<16x128xf32>
    %c0_1 = arith.constant 0 : index
    %c0_2 = arith.constant 0 : index
    %1 = vector.load %arg2[%c0_1, %c0_2] : memref<16x128xf32, #tpu.memory_space<vmem>>, vector<16x128xf32>
    tpu.vector_store %arg2[%c0_1, %c0_2], %0 {strides = array<i32>} : memref<16x128xf32, #tpu.memory_space<vmem>>, vector<16x128xf32>,
    return
  }
  func.func @transform_0(%arg0: i32) -> (i32, i32) {
    %c0_i32 = arith.constant 0 : i32
    %c0_i32_0 = arith.constant 0 : i32
    return %arg0, %c0_i32 : i32, i32
  }
  func.func @transform_1(%arg0: i32) -> (i32, i32) {
    %c0_i32 = arith.constant 0 : i32
    %c0_i32_0 = arith.constant 0 : i32
    return %arg0, %c0_i32 : i32, i32
  }
}

</mosaic_0001>

<llo_original>
// kernel: generated_image_forward.1
$region0: #{generated_image_forward.1}
  #allocation0 [shape = 'u32[]', space=smem, size = 0x4, offset = 0x4, fixed_abs, tag = 'smem constant byte address 0x4 - core index']
  #allocation1 [shape = 'u32[72,128]{1,0:T(1,128)}', space=vmem, size = 0x9000, scoped, tag = 'internal scratch']
  %s0 = inlined_call_operand.vmem [shape: f32[16,128], index: 0, kind: input, shape index: {}, may-alias: {0,1}]
  %s1 = inlined_call_operand.vmem [shape: f32[16,128], index: 1, kind: output, shape index: {}, may-alias: {0,1}]
  %s2 = sld [smem:[#allocation0]]
  $region14: #{generated_image_forward.1} parent=0
    _
  %s4 = ssub.s32 1, %s2
  %s5 = scalar_select 0, %s4, %s2
  // Predicated region
  $region2: #{generated_image_forward.1} parent=0 // pred_check
    _
  $region3: #{generated_image_forward.1} parent=0 // pred_check_branch
    %7 = sbr.rel (0) target = $region5
  $region4: #{generated_image_forward.1} parent=0 // pred_region
    _
  $region5: #{generated_image_forward.1} parent=0 // pred_fallthru
    _
  %v8 = vld [vmem:[%s0] sm:$0xff]
  %v9 = vld [vmem:[%s0 + $0x8] sm:$0xff]
  %10 = vst [vmem:[%s1] sm:$0xff] %v8
  %11 = vst [vmem:[%s1 + $0x8] sm:$0xff] %v9
  // Predicated region
  $region6: #{generated_image_forward.1} parent=0 // pred_check
    _
  $region7: #{generated_image_forward.1} parent=0 // pred_check_branch
    %13 = sbr.rel (0) target = $region9
  $region8: #{generated_image_forward.1} parent=0 // pred_region
    _
  $region9: #{generated_image_forward.1} parent=0 // pred_fallthru
    _
  // Predicated region
  $region10: #{generated_image_forward.1} parent=0 // pred_check
    _
  $region11: #{generated_image_forward.1} parent=0 // pred_check_branch
    %15 = sbr.rel (0) target = $region13
  $region12: #{generated_image_forward.1} parent=0 // pred_region
    _
  $region13: #{generated_image_forward.1} parent=0 // pred_fallthru
    _

</llo_original>
